<compile_context>
chip_gen: v7x
topology: tpu7x:2x2x1
jax: 0.10.0
libtpu: 0.0.40
codegen_flags: <defaults>
</compile_context>

<pallas_src>
import functools

import jax
import jax.numpy as jnp
from jax.experimental import pallas as pl
from jax.experimental.pallas import tpu as pltpu


def _round_up(x, m):
    return ((x + m - 1) // m) * m


def _bpr_reg_kernel(cu_ref, cp_ref, cn_ref, ru_ref, rp_ref, rn_ref, out_ref,
                    *, batch_size, tile_b):
    """One (D, tile_b) batch tile -> one lane-dense (1, 8, 128) partial-sum block.

    out[step, 0, 0] = sum over valid tile columns of softplus(neg - pos)
    out[step, 1, 0] = sum of squared raw embeddings over valid tile columns
    """
    step = pl.program_id(0)

    cu = cu_ref[...].astype(jnp.float32)   # (D, tile_b) -- batch on the lane axis
    cp = cp_ref[...].astype(jnp.float32)
    cn = cn_ref[...].astype(jnp.float32)

    # Fused score math: neg_score - pos_score = sum_d u * (neg - pos).
    # One product, one D-axis (sublane) reduction; result is lane-dense (1, tile_b).
    x = jnp.sum(cu * (cn - cp), axis=0, keepdims=True)

    # Numerically stable softplus (== torch.nn.functional.softplus), lane-dense.
    sp = jnp.maximum(x, 0.0) + jnp.log1p(jnp.exp(-jnp.abs(x)))

    # Validity mask for columns introduced by padding the index vectors.
    col = jax.lax.broadcasted_iota(jnp.int32, (1, tile_b), 1) + step * tile_b
    valid = col < batch_size
    sp_sum = jnp.sum(jnp.where(valid, sp, 0.0))

    # L2 regularization partial (p = 2): single fused elementwise pass, ONE reduction.
    # Padded columns hold row-0 embeddings (indices padded with 0), so they MUST be
    # masked here as well.
    ru = ru_ref[...].astype(jnp.float32)
    rp = rp_ref[...].astype(jnp.float32)
    rn = rn_ref[...].astype(jnp.float32)
    sq = ru * ru + rp * rp + rn * rn
    sq_sum = jnp.sum(jnp.where(valid, sq, 0.0))

    # Lane-dense (8, 128) output block: sublane 0 = BPR partial, sublane 1 = L2
    # partial, everything else zero.  Full-width unmasked store.
    row = jax.lax.broadcasted_iota(jnp.int32, (8, 128), 0)
    blk = jnp.where(row == 0, sp_sum, jnp.where(row == 1, sq_sum, 0.0))
    out_ref[...] = blk[None, :, :]


def _vmem_budget_bytes():
    """(tile-sizing budget, vmem_limit_bytes) chosen per TPU generation."""
    kind = ""
    try:
        kind = jax.devices()[0].device_kind.lower()
    except Exception:
        pass
    if "v7" in kind or "tpu7" in kind:
        # v7x: 64 MiB physical VMEM per TensorCore, 32 MiB scoped default.
        limit = 32 << 20
    elif "v5 lite" in kind or "v5e" in kind or "v5lite" in kind:
        # v5e: 128 MiB physical, but only a 16 MiB scoped default -> raise it.
        limit = 32 << 20
    else:
        # v6e / v4 / fallback: 128 MiB physical, 32 MiB scoped default -> raise it.
        # (Also safe if a v7x device_kind string is not matched above: 48 < 64 MiB.)
        limit = 48 << 20
    return int(limit * 0.7), limit


def _choose_tile_b(batch, d_pad, itemsize, budget_bytes, cap=8192):
    """Largest 128-aligned tile (<= cap columns) such that the six double-buffered
    (d_pad, tile) input streams fit in budget_bytes of scoped VMEM."""
    b128 = _round_up(max(int(batch), 1), 128)
    tile = cap
    while tile > 128 and 12 * d_pad * tile * itemsize > budget_bytes:
        tile //= 2
    # Keep >= 2 grid steps when the batch allows it so the "parallel" grid axis can
    # actually feed both v7x TensorCores.
    if b128 > 256 and tile * 2 > b128:
        tile = _round_up(b128 // 2, 128)
    return max(128, min(tile, b128))


def bpr_reg_loss(emb_users, emb_items, users, pos_items, neg_items,
                 raw_emb_users, raw_emb_items, *, weight_decay=1e-4, tile_b=None):
    B = int(users.shape[0])
    D = int(emb_users.shape[1])
    d_pad = _round_up(D, 8)                                   # sublane padding in VMEM
    itemsize = jnp.dtype(emb_users.dtype).itemsize

    budget, vmem_limit = _vmem_budget_bytes()
    if tile_b is None:
        tile_b = _choose_tile_b(B, d_pad, itemsize, budget)
    tile_b = max(128, _round_up(int(tile_b), 128))            # lane-aligned tiles
    tile_b = min(tile_b, _round_up(B, 128))
    B_pad = _round_up(B, tile_b)
    num_tiles = B_pad // tile_b

    # Pad the *index vectors* (NOT the gathered matrices): no extra read+write pass
    # over the six (B, D) streams.  Padded entries point at row 0 and are masked out
    # of both loss terms inside the kernel.
    def _pad_idx(idx):
        return idx if B_pad == B else jnp.pad(idx, (0, B_pad - B))

    u_idx = _pad_idx(users)
    p_idx = _pad_idx(pos_items)
    n_idx = _pad_idx(neg_items)

    # Gather once, then present the batch on the lane axis so D=32..64 tiles are
    # lane-dense inside the kernel (full-width loads / VALU / EUP work).
    # TODO(synk): fuse the row gathers into the kernel (scalar-prefetched indices +
    # per-row DMA) or gather directly into (D, B) layout to drop this transpose pass.
    ins = [jnp.swapaxes(a, 0, 1) for a in (
        emb_users[u_idx], emb_items[p_idx], emb_items[n_idx],
        raw_emb_users[u_idx], raw_emb_items[p_idx], raw_emb_items[n_idx])]

    col_spec = pl.BlockSpec((D, tile_b), lambda i: (0, i))
    kernel = functools.partial(_bpr_reg_kernel, batch_size=B, tile_b=tile_b)

    partials = pl.pallas_call(
        kernel,
        out_shape=jax.ShapeDtypeStruct((num_tiles, 8, 128), jnp.float32),
        grid_spec=pltpu.PrefetchScalarGridSpec(
            num_scalar_prefetch=0,
            grid=(num_tiles,),
            in_specs=[col_spec] * 6,
            out_specs=pl.BlockSpec((1, 8, 128), lambda i: (i, 0, 0)),
        ),
        compiler_params=pltpu.CompilerParams(
            # Independent per-tile outputs -> megacore (v7x) can shard the batch.
            dimension_semantics=("parallel",),
            vmem_limit_bytes=vmem_limit,
        ),
    )(*ins)

    sp_total = jnp.sum(partials[:, 0, 0])
    sq_total = jnp.sum(partials[:, 1, 0])
    loss_bpr = sp_total / B
    loss_l2 = weight_decay * 0.5 * sq_total / B               # p = 2
    return loss_bpr + loss_l2


def _reference_loss(emb_users, emb_items, users, pos_items, neg_items,
                    raw_emb_users, raw_emb_items, weight_decay):
    cur_u = emb_users[users]
    cur_pos = emb_items[pos_items]
    cur_neg = emb_items[neg_items]
    pos_scores = jnp.sum(cur_u * cur_pos, axis=1)
    neg_scores = jnp.sum(cur_u * cur_neg, axis=1)
    loss_bpr = jnp.mean(jax.nn.softplus(neg_scores - pos_scores))
    raw_u = raw_emb_users[users]
    raw_pos = raw_emb_items[pos_items]
    raw_neg = raw_emb_items[neg_items]
    sq = jnp.sum(raw_u ** 2) + jnp.sum(raw_pos ** 2) + jnp.sum(raw_neg ** 2)
    loss_l2 = weight_decay * 0.5 * sq / users.shape[0]
    return loss_bpr + loss_l2


if __name__ == "__main__":
    key = jax.random.PRNGKey(0)
    k1, k2, k3, k4, k5, k6, k7 = jax.random.split(key, 7)

    # Small config consistent with the module (LightGCN embeddings, BPR triplets).
    num_users, num_items, D, B = 16, 24, 32, 8
    weight_decay = 1e-4  # module hyperparameter, set deterministically

    emb_users = jax.random.normal(k1, (num_users, D), jnp.float32)
    emb_items = jax.random.normal(k2, (num_items, D), jnp.float32)
    raw_emb_users = jax.random.normal(k3, (num_users, D), jnp.float32)
    raw_emb_items = jax.random.normal(k4, (num_items, D), jnp.float32)
    users = jax.random.randint(k5, (B,), 0, num_users)
    pos_items = jax.random.randint(k6, (B,), 0, num_items)
    neg_items = jax.random.randint(k7, (B,), 0, num_items)

    loss = bpr_reg_loss(emb_users, emb_items, users, pos_items, neg_items,
                        raw_emb_users, raw_emb_items, weight_decay=weight_decay)
    loss = jax.block_until_ready(loss)
    ref = _reference_loss(emb_users, emb_items, users, pos_items, neg_items,
                          raw_emb_users, raw_emb_items, weight_decay)
    assert jnp.allclose(loss, ref, rtol=1e-5, atol=1e-5), (loss, ref)

    # Second config exercising the multi-tile / padded-and-masked path (grid > 1),
    # which now also validates that padded (row-0) columns are masked from the L2 term.
    num_users2, num_items2, D2, B2 = 64, 96, 64, 300
    e_u = jax.random.normal(k1, (num_users2, D2), jnp.float32)
    e_i = jax.random.normal(k2, (num_items2, D2), jnp.float32)
    r_u = jax.random.normal(k3, (num_users2, D2), jnp.float32)
    r_i = jax.random.normal(k4, (num_items2, D2), jnp.float32)
    us = jax.random.randint(k5, (B2,), 0, num_users2)
    ps = jax.random.randint(k6, (B2,), 0, num_items2)
    ns = jax.random.randint(k7, (B2,), 0, num_items2)
    loss2 = jax.block_until_ready(
        bpr_reg_loss(e_u, e_i, us, ps, ns, r_u, r_i,
                     weight_decay=weight_decay, tile_b=128))
    ref2 = _reference_loss(e_u, e_i, us, ps, ns, r_u, r_i, weight_decay)
    assert jnp.allclose(loss2, ref2, rtol=1e-5, atol=1e-5), (loss2, ref2)

    print("KERNEL_OK")
</pallas_src>

<mosaic_0001>
module attributes {stable_mosaic.version = 11 : i64} {
  func.func @_bpr_reg_kernel(%arg0: i32, %arg1: memref<32x128xf32, #tpu.memory_space<vmem>>, %arg2: memref<32x128xf32, #tpu.memory_space<vmem>>, %arg3: memref<32x128xf32, #tpu.memory_space<vmem>>, %arg4: memref<32x128xf32, #tpu.memory_space<vmem>>, %arg5: memref<32x128xf32, #tpu.memory_space<vmem>>, %arg6: memref<32x128xf32, #tpu.memory_space<vmem>>, %arg7: memref<1x8x128xf32, #tpu.memory_space<vmem>>) attributes {dimension_semantics = [#tpu.dimension_semantics<parallel>], iteration_bounds = array<i64: 1>, scalar_prefetch = 0 : i64, scratch_operands = 0 : i64, tpu.core_type = #tpu.core_type<tc>, window_params = [{transform_indices = @transform_0, window_bounds = array<i64: 32, 128>}, {transform_indices = @transform_1, window_bounds = array<i64: 32, 128>}, {transform_indices = @transform_2, window_bounds = array<i64: 32, 128>}, {transform_indices = @transform_3, window_bounds = array<i64: 32, 128>}, {transform_indices = @transform_4, window_bounds = array<i64: 32, 128>}, {transform_indices = @transform_5, window_bounds = array<i64: 32, 128>}, {transform_indices = @transform_6, window_bounds = array<i64: 1, 8, 128>}]} {
    %c0 = arith.constant 0 : index
    %c0_0 = arith.constant 0 : index
    %0 = vector.load %arg1[%c0, %c0_0] : memref<32x128xf32, #tpu.memory_space<vmem>>, vector<32x128xf32>
    %c0_1 = arith.constant 0 : index
    %c0_2 = arith.constant 0 : index
    %1 = vector.load %arg2[%c0_1, %c0_2] : memref<32x128xf32, #tpu.memory_space<vmem>>, vector<32x128xf32>
    %c0_3 = arith.constant 0 : index
    %c0_4 = arith.constant 0 : index
    %2 = vector.load %arg3[%c0_3, %c0_4] : memref<32x128xf32, #tpu.memory_space<vmem>>, vector<32x128xf32>
    %3 = arith.subf %2, %1 : vector<32x128xf32>
    %4 = arith.mulf %0, %3 : vector<32x128xf32>
    %cst = arith.constant dense<0.000000e+00> : vector<128xf32>
    %5 = vector.multi_reduction <add>, %4, %cst [0] : vector<32x128xf32> to vector<128xf32>
    %6 = vector.shape_cast %5 : vector<128xf32> to vector<1x128xf32>
    %cst_5 = arith.constant 0.000000e+00 : f32
    %7 = vector.broadcast %cst_5 : f32 to vector<1x128xf32>
    %8 = arith.maximumf %6, %7 : vector<1x128xf32>
    %9 = math.absf %6 : vector<1x128xf32>
    %cst_6 = arith.constant 0.000000e+00 : f32
    %10 = vector.broadcast %cst_6 : f32 to vector<1x128xf32>
    %11 = arith.subf %10, %9 : vector<1x128xf32>
    %12 = math.exp %11 : vector<1x128xf32>
    %13 = math.log1p %12 : vector<1x128xf32>
    %14 = arith.addf %8, %13 : vector<1x128xf32>
    %15 = tpu.iota {dimensions = array<i32: 1>} : vector<1x128xi32>
    %c128_i32 = arith.constant 128 : i32
    %16 = arith.muli %arg0, %c128_i32 : i32
    %17 = vector.broadcast %16 : i32 to vector<1x128xi32>
    %18 = arith.addi %15, %17 : vector<1x128xi32>
    %c8_i32 = arith.constant 8 : i32
    %19 = vector.broadcast %c8_i32 : i32 to vector<1x128xi32>
    %20 = arith.cmpi slt, %18, %19 : vector<1x128xi32>
    %cst_7 = arith.constant 0.000000e+00 : f32
    %21 = vector.broadcast %cst_7 : f32 to vector<1x128xf32>
    %22 = arith.select %20, %14, %21 : vector<1x128xi1>, vector<1x128xf32>
    %23 = vector.shape_cast %22 : vector<1x128xf32> to vector<1x1x128xf32>
    %cst_8 = arith.constant dense<0.000000e+00> : vector<1xf32>
    %24 = vector.multi_reduction <add>, %23, %cst_8 [1, 2] : vector<1x1x128xf32> to vector<1xf32>
    %25 = vector.shape_cast %24 : vector<1xf32> to vector<1x1x1xf32>
    %26 = vector.extract %25[0, 0, 0] : f32 from vector<1x1x1xf32>
    %c0_9 = arith.constant 0 : index
    %c0_10 = arith.constant 0 : index
    %27 = vector.load %arg4[%c0_9, %c0_10] : memref<32x128xf32, #tpu.memory_space<vmem>>, vector<32x128xf32>
    %c0_11 = arith.constant 0 : index
    %c0_12 = arith.constant 0 : index
    %28 = vector.load %arg5[%c0_11, %c0_12] : memref<32x128xf32, #tpu.memory_space<vmem>>, vector<32x128xf32>
    %c0_13 = arith.constant 0 : index
    %c0_14 = arith.constant 0 : index
    %29 = vector.load %arg6[%c0_13, %c0_14] : memref<32x128xf32, #tpu.memory_space<vmem>>, vector<32x128xf32>
    %30 = arith.mulf %27, %27 : vector<32x128xf32>
    %31 = arith.mulf %28, %28 : vector<32x128xf32>
    %32 = arith.addf %30, %31 : vector<32x128xf32>
    %33 = arith.mulf %29, %29 : vector<32x128xf32>
    %34 = arith.addf %32, %33 : vector<32x128xf32>
    %cst_15 = arith.constant 0.000000e+00 : f32
    %35 = vector.shape_cast %20 : vector<1x128xi1> to vector<1x128xi1>
    %36 = vector.broadcast %35 : vector<1x128xi1> to vector<32x128xi1>
    %37 = vector.broadcast %cst_15 : f32 to vector<32x128xf32>
    %38 = arith.select %36, %34, %37 : vector<32x128xi1>, vector<32x128xf32>
    %39 = vector.shape_cast %38 : vector<32x128xf32> to vector<1x32x128xf32>
    %cst_16 = arith.constant dense<0.000000e+00> : vector<1xf32>
    %40 = vector.multi_reduction <add>, %39, %cst_16 [1, 2] : vector<1x32x128xf32> to vector<1xf32>
    %41 = vector.shape_cast %40 : vector<1xf32> to vector<1x1x1xf32>
    %42 = vector.extract %41[0, 0, 0] : f32 from vector<1x1x1xf32>
    %43 = tpu.iota {dimensions = array<i32: 0>} : vector<8x128xi32>
    %c0_i32 = arith.constant 0 : i32
    %44 = vector.broadcast %c0_i32 : i32 to vector<8x128xi32>
    %45 = arith.cmpi eq, %43, %44 : vector<8x128xi32>
    %c1_i32 = arith.constant 1 : i32
    %46 = vector.broadcast %c1_i32 : i32 to vector<8x128xi32>
    %47 = arith.cmpi eq, %43, %46 : vector<8x128xi32>
    %cst_17 = arith.constant 0.000000e+00 : f32
    %48 = vector.broadcast %42 : f32 to vector<8x128xf32>
    %49 = vector.broadcast %cst_17 : f32 to vector<8x128xf32>
    %50 = arith.select %47, %48, %49 : vector<8x128xi1>, vector<8x128xf32>
    %51 = vector.broadcast %26 : f32 to vector<8x128xf32>
    %52 = arith.select %45, %51, %50 : vector<8x128xi1>, vector<8x128xf32>
    %53 = vector.shape_cast %52 : vector<8x128xf32> to vector<1x8x128xf32>
    %c0_18 = arith.constant 0 : index
    %c0_19 = arith.constant 0 : index
    %c0_20 = arith.constant 0 : index
    %54 = vector.load %arg7[%c0_18, %c0_19, %c0_20] : memref<1x8x128xf32, #tpu.memory_space<vmem>>, vector<1x8x128xf32>
    tpu.vector_store %arg7[%c0_18, %c0_19, %c0_20], %53 {strides = array<i32>} : memref<1x8x128xf32, #tpu.memory_space<vmem>>, vector<1x8x128xf32>,
    return
  }
  func.func @transform_0(%arg0: i32) -> (i32, i32) {
    %c0_i32 = arith.constant 0 : i32
    %c0_i32_0 = arith.constant 0 : i32
    return %c0_i32, %arg0 : i32, i32
  }
  func.func @transform_1(%arg0: i32) -> (i32, i32) {
    %c0_i32 = arith.constant 0 : i32
    %c0_i32_0 = arith.constant 0 : i32
    return %c0_i32, %arg0 : i32, i32
  }
  func.func @transform_2(%arg0: i32) -> (i32, i32) {
    %c0_i32 = arith.constant 0 : i32
    %c0_i32_0 = arith.constant 0 : i32
    return %c0_i32, %arg0 : i32, i32
  }
  func.func @transform_3(%arg0: i32) -> (i32, i32) {
    %c0_i32 = arith.constant 0 : i32
    %c0_i32_0 = arith.constant 0 : i32
    return %c0_i32, %arg0 : i32, i32
  }
  func.func @transform_4(%arg0: i32) -> (i32, i32) {
    %c0_i32 = arith.constant 0 : i32
    %c0_i32_0 = arith.constant 0 : i32
    return %c0_i32, %arg0 : i32, i32
  }
  func.func @transform_5(%arg0: i32) -> (i32, i32) {
    %c0_i32 = arith.constant 0 : i32
    %c0_i32_0 = arith.constant 0 : i32
    return %c0_i32, %arg0 : i32, i32
  }
  func.func @transform_6(%arg0: i32) -> (i32, i32, i32) {
    %c0_i32 = arith.constant 0 : i32
    %c0_i32_0 = arith.constant 0 : i32
    %c0_i32_1 = arith.constant 0 : i32
    return %arg0, %c0_i32, %c0_i32_0 : i32, i32, i32
  }
}

</mosaic_0001>

<llo_original>
// kernel: tpu_custom_call.1
$region0: #{tpu_custom_call.1}
  #allocation0 [shape = 'u32[]', space=smem, size = 0x4, offset = 0x4, fixed_abs, tag = 'smem constant byte address 0x4 - core index']
  #allocation1 [shape = 'u32[144,128]{1,0:T(1,128)}', space=vmem, size = 0x12000, scoped, tag = 'internal scratch']
  %s0 = inlined_call_operand.hbm [shape: f32[32,128], index: 0, kind: input, shape index: {}]
  %s1 = inlined_call_operand.hbm [shape: f32[32,128], index: 1, kind: input, shape index: {}]
  %s2 = inlined_call_operand.hbm [shape: f32[32,128], index: 2, kind: input, shape index: {}]
  %s3 = inlined_call_operand.hbm [shape: f32[32,128], index: 3, kind: input, shape index: {}]
  %s4 = inlined_call_operand.hbm [shape: f32[32,128], index: 4, kind: input, shape index: {}]
  %s5 = inlined_call_operand.hbm [shape: f32[32,128], index: 5, kind: input, shape index: {}]
  %s6 = inlined_call_operand.hbm [shape: f32[1,8,128], index: 6, kind: output, shape index: {}]
  %s7 = sld [smem:[#allocation0]]
  $region58: #{tpu_custom_call.1} parent=0
    _
  %s9 = ssub.s32 1, %s7
  %s10 = scalar_select 0, %s9, %s7
  $region1: #{tpu_custom_call.1} parent=0
    #allocation2 [shape = 'u8[16384]{0}', space=vmem, size = 0x4000, scoped, tag = 'input window, operand 0, single buffered']
    #allocation3 [shape = 's32[1]{0}', space=sflag, size = 0x4, scoped, tag = 'scoped memory for tpu_custom_call.1']
    #allocation4 [shape = 's32[1]{0}', space=sflag, size = 0x4, scoped, tag = 'scoped memory for tpu_custom_call.1']
    #allocation5 [shape = 'u8[16384]{0}', space=vmem, size = 0x4000, scoped, tag = 'input window, operand 1, single buffered']
    #allocation6 [shape = 's32[1]{0}', space=sflag, size = 0x4, scoped, tag = 'scoped memory for tpu_custom_call.1']
    #allocation7 [shape = 'u8[16384]{0}', space=vmem, size = 0x4000, scoped, tag = 'input window, operand 2, single buffered']
    #allocation8 [shape = 'u8[16384]{0}', space=vmem, size = 0x4000, scoped, tag = 'input window, operand 3, single buffered']
    #allocation9 [shape = 's32[1]{0}', space=sflag, size = 0x4, scoped, tag = 'scoped memory for tpu_custom_call.1']
    #allocation10 [shape = 'u8[16384]{0}', space=vmem, size = 0x4000, scoped, tag = 'input window, operand 4, single buffered']
    #allocation11 [shape = 'u8[16384]{0}', space=vmem, size = 0x4000, scoped, tag = 'input window, operand 5, single buffered']
    #allocation12 [shape = 's32[1]{0}', space=sflag, size = 0x4, scoped, tag = 'scoped memory for tpu_custom_call.1']
    #allocation13 [shape = 'u8[4096]{0}', space=vmem, size = 0x1000, scoped, tag = 'output window, operand 0, single buffered']
    %11 = vsyncpa [#allocation3], 0
    %12 = vsyncpa [#allocation6], 0
    %13 = vsyncpa [#allocation9], 0
    %14 = vsyncpa [#allocation12], 0
    %15 = vsyncpa [#allocation4], 0
    // Predicated region
    $region2: #{tpu_custom_call.1} parent=1 // pred_check
      _
    $region3: #{tpu_custom_call.1} parent=1 // pred_check_branch
      %17 = sbr.rel (0) target = $region5
    $region4: #{tpu_custom_call.1} parent=1 // pred_region
      %s19 = ssub.s32 512, 512
      %20 = vsyncadd [#allocation3], %s19
      %s21 = sshll.u32 [#allocation2], 4
      %s22 = int_to_ptr.vmem [resolvable:$true] %s21
      %27 = dma.hbm_to_vmem [thread:$0]  %s0, 512, %s22, [#allocation3], 128, 128, 8
    $region5: #{tpu_custom_call.1} parent=1 // pred_fallthru
      _
    // Predicated region
    $region6: #{tpu_custom_call.1} parent=1 // pred_check
      _
    $region7: #{tpu_custom_call.1} parent=1 // pred_check_branch
      %29 = sbr.rel (0) target = $region9
    $region8: #{tpu_custom_call.1} parent=1 // pred_region
      %s31 = ssub.s32 512, 512
      %32 = vsyncadd [#allocation6], %s31
      %s33 = sshll.u32 [#allocation5], 4
      %s34 = int_to_ptr.vmem [resolvable:$true] %s33
      %39 = dma.hbm_to_vmem [thread:$0]  %s1, 512, %s34, [#allocation6], 128, 128, 8
    $region9: #{tpu_custom_call.1} parent=1 // pred_fallthru
      _
    // Predicated region
    $region10: #{tpu_custom_call.1} parent=1 // pred_check
      _
    $region11: #{tpu_custom_call.1} parent=1 // pred_check_branch
      %41 = sbr.rel (0) target = $region13
    $region12: #{tpu_custom_call.1} parent=1 // pred_region
      %s43 = ssub.s32 512, 512
      %44 = vsyncadd [#allocation6], %s43
      %s45 = sshll.u32 [#allocation7], 4
      %s46 = int_to_ptr.vmem [resolvable:$true] %s45
      %51 = dma.hbm_to_vmem [thread:$0]  %s2, 512, %s46, [#allocation6], 128, 128, 8
    $region13: #{tpu_custom_call.1} parent=1 // pred_fallthru
      _
    // Predicated region
    $region14: #{tpu_custom_call.1} parent=1 // pred_check
      _
    $region15: #{tpu_custom_call.1} parent=1 // pred_check_branch
      %53 = sbr.rel (0) target = $region17
    $region16: #{tpu_custom_call.1} parent=1 // pred_region
      %s55 = ssub.s32 512, 512
      %56 = vsyncadd [#allocation9], %s55
      %s57 = sshll.u32 [#allocation8], 4
      %s58 = int_to_ptr.vmem [resolvable:$true] %s57
      %63 = dma.hbm_to_vmem [thread:$0]  %s3, 512, %s58, [#allocation9], 128, 128, 8
    $region17: #{tpu_custom_call.1} parent=1 // pred_fallthru
      _
    // Predicated region
    $region18: #{tpu_custom_call.1} parent=1 // pred_check
      _
    $region19: #{tpu_custom_call.1} parent=1 // pred_check_branch
      %65 = sbr.rel (0) target = $region21
    $region20: #{tpu_custom_call.1} parent=1 // pred_region
      %s67 = ssub.s32 512, 512
      %68 = vsyncadd [#allocation9], %s67
      %s69 = sshll.u32 [#allocation10], 4
      %s70 = int_to_ptr.vmem [resolvable:$true] %s69
      %75 = dma.hbm_to_vmem [thread:$0]  %s4, 512, %s70, [#allocation9], 128, 128, 8
    $region21: #{tpu_custom_call.1} parent=1 // pred_fallthru
      _
    // Predicated region
    $region22: #{tpu_custom_call.1} parent=1 // pred_check
      _
    $region23: #{tpu_custom_call.1} parent=1 // pred_check_branch
      %77 = sbr.rel (0) target = $region25
    $region24: #{tpu_custom_call.1} parent=1 // pred_region
      %s79 = ssub.s32 512, 512
      %80 = vsyncadd [#allocation12], %s79
      %s81 = sshll.u32 [#allocation11], 4
      %s82 = int_to_ptr.vmem [resolvable:$true] %s81
      %87 = dma.hbm_to_vmem [thread:$0]  %s5, 512, %s82, [#allocation12], 128, 128, 8
    $region25: #{tpu_custom_call.1} parent=1 // pred_fallthru
      _
    // Predicated region
    $region26: #{tpu_custom_call.1} parent=1 // pred_check
      _
    $region27: #{tpu_custom_call.1} parent=1 // pred_check_branch
      %89 = sbr.rel (0) target = $region29
    $region28: #{tpu_custom_call.1} parent=1 // pred_region
      %90 = dma.done [#allocation3], 512
    $region29: #{tpu_custom_call.1} parent=1 // pred_fallthru
      _
    // Predicated region
    $region30: #{tpu_custom_call.1} parent=1 // pred_check
      _
    $region31: #{tpu_custom_call.1} parent=1 // pred_check_branch
      %92 = sbr.rel (0) target = $region33
    $region32: #{tpu_custom_call.1} parent=1 // pred_region
      %93 = dma.done [#allocation6], 512
    $region33: #{tpu_custom_call.1} parent=1 // pred_fallthru
      _
    // Predicated region
    $region34: #{tpu_custom_call.1} parent=1 // pred_check
      _
    $region35: #{tpu_custom_call.1} parent=1 // pred_check_branch
      %95 = sbr.rel (0) target = $region37
    $region36: #{tpu_custom_call.1} parent=1 // pred_region
      %96 = dma.done [#allocation6], 512
    $region37: #{tpu_custom_call.1} parent=1 // pred_fallthru
      _
    // Predicated region
    $region38: #{tpu_custom_call.1} parent=1 // pred_check
      _
    $region39: #{tpu_custom_call.1} parent=1 // pred_check_branch
      %98 = sbr.rel (0) target = $region41
    $region40: #{tpu_custom_call.1} parent=1 // pred_region
      %99 = dma.done [#allocation9], 512
    $region41: #{tpu_custom_call.1} parent=1 // pred_fallthru
      _
    // Predicated region
    $region42: #{tpu_custom_call.1} parent=1 // pred_check
      _
    $region43: #{tpu_custom_call.1} parent=1 // pred_check_branch
      %101 = sbr.rel (0) target = $region45
    $region44: #{tpu_custom_call.1} parent=1 // pred_region
      %102 = dma.done [#allocation9], 512
    $region45: #{tpu_custom_call.1} parent=1 // pred_fallthru
      _
    // Predicated region
    $region46: #{tpu_custom_call.1} parent=1 // pred_check
      _
    $region47: #{tpu_custom_call.1} parent=1 // pred_check_branch
      %104 = sbr.rel (0) target = $region49
    $region48: #{tpu_custom_call.1} parent=1 // pred_region
      %105 = dma.done [#allocation12], 512
    $region49: #{tpu_custom_call.1} parent=1 // pred_fallthru
      _
    %v106 = vld [vmem:[#allocation2] sm:$0xff]
    %v107 = vld [vmem:[#allocation2 + $0x8] sm:$0xff]
    %v108 = vld [vmem:[#allocation2 + $0x10] sm:$0xff]
    %v109 = vld [vmem:[#allocation2 + $0x18] sm:$0xff]
    %v110 = vld [vmem:[#allocation5] sm:$0xff]
    %v111 = vld [vmem:[#allocation5 + $0x8] sm:$0xff]
    %v112 = vld [vmem:[#allocation5 + $0x10] sm:$0xff]
    %v113 = vld [vmem:[#allocation5 + $0x18] sm:$0xff]
    %v114 = vld [vmem:[#allocation7] sm:$0xff]
    %v115 = vld [vmem:[#allocation7 + $0x8] sm:$0xff]
    %v116 = vld [vmem:[#allocation7 + $0x10] sm:$0xff]
    %v117 = vld [vmem:[#allocation7 + $0x18] sm:$0xff]
    %v118 = vsub.f32 %v114, %v110
    %v119 = vsub.f32 %v115, %v111
    %v120 = vsub.f32 %v116, %v112
    %v121 = vsub.f32 %v117, %v113
    %v122 = vmul.f32 %v106, %v118
    %v123 = vmul.f32 %v107, %v119
    %v124 = vmul.f32 %v108, %v120
    %v125 = vmul.f32 %v109, %v121
    %v126 = vadd.f32 %v122, %v123
    %v127 = vadd.f32 %v126, %v124
    %v128 = vadd.f32 %v127, %v125
    %v129 = vrot.slane %v128, 4
    %v130 = vadd.f32 %v128, %v129
    %v131 = vrot.slane %v130, 2
    %v132 = vadd.f32 %v130, %v131
    %v133 = vrot.slane %v132, 1
    %v134 = vadd.f32 %v132, %v133
    %v135 = vmax.f32 %v134, 0.0
    %v136 = vand.u32 2147483647, %v134
    %v137 = vsub.f32 0.0, %v136
    %v138 = vmul.f32 %v137, 1.442695
    %v139 = vpow.pop %v138
    %v140 = vadd.f32 %v139, 1.0
    %v141 = vlog2.pop %v140
    %v142 = vmul.f32 %v141, 0.6931472
    %v143 = vmul.f32 -0.5, %v139
    %v144 = vadd.f32 %v143, 1.0
    %v145 = vmul.f32 %v144, %v139
    %v146 = vand.u32 2147483647, %v139
    %vm147 = vcmp.lt.f32.partialorder %v146, 0.0004427343
    %v148 = vsel %vm147, %v145, %v142
    %v149 = vadd.f32 %v135, %v148
    %v150 = vlaneseq
    %v151 = vand.u32 %v150, 127
    %s152 = smul.u32 0, 128
    %v153 = vstv %s152
    %v154 = vadd.s32 %v151, %v153
    %vm155 = vcmp.lt.s32.totalorder %v154, 8
    %v156 = vsel %vm155, %v149, 0.0
    %vm157 = vcmask 1040384
    %v158 = vsel %vm157, %v156, 0.0
    %159 = vadd.xlane.f32.xlu0 %v158
    %v160 = vpop.xlane.xlu0 %159
    %v161 = vrot.slane %v160, 4
    %v162 = vadd.f32 %v160, %v161
    %v163 = vrot.slane %v162, 2
    %v164 = vadd.f32 %v162, %v163
    %v165 = vrot.slane %v164, 1
    %v166 = vadd.f32 %v164, %v165
    %s167 = vtos %v166
    %v168 = vld [vmem:[#allocation8] sm:$0xff]
    %v169 = vld [vmem:[#allocation8 + $0x8] sm:$0xff]
    %v170 = vld [vmem:[#allocation8 + $0x10] sm:$0xff]
    %v171 = vld [vmem:[#allocation8 + $0x18] sm:$0xff]
    %v172 = vld [vmem:[#allocation10] sm:$0xff]
    %v173 = vld [vmem:[#allocation10 + $0x8] sm:$0xff]
    %v174 = vld [vmem:[#allocation10 + $0x10] sm:$0xff]
    %v175 = vld [vmem:[#allocation10 + $0x18] sm:$0xff]
    %v176 = vld [vmem:[#allocation11] sm:$0xff]
    %v177 = vld [vmem:[#allocation11 + $0x8] sm:$0xff]
    %v178 = vld [vmem:[#allocation11 + $0x10] sm:$0xff]
    %v179 = vld [vmem:[#allocation11 + $0x18] sm:$0xff]
    %v180 = vmul.f32 %v168, %v168
    %v181 = vmul.f32 %v169, %v169
    %v182 = vmul.f32 %v170, %v170
    %v183 = vmul.f32 %v171, %v171
    %v184 = vmul.f32 %v172, %v172
    %v185 = vmul.f32 %v173, %v173
    %v186 = vmul.f32 %v174, %v174
    %v187 = vmul.f32 %v175, %v175
    %v188 = vadd.f32 %v180, %v184
    %v189 = vadd.f32 %v181, %v185
    %v190 = vadd.f32 %v182, %v186
    %v191 = vadd.f32 %v183, %v187
    %v192 = vmul.f32 %v176, %v176
    %v193 = vmul.f32 %v177, %v177
    %v194 = vmul.f32 %v178, %v178
    %v195 = vmul.f32 %v179, %v179
    %v196 = vadd.f32 %v188, %v192
    %v197 = vadd.f32 %v189, %v193
    %v198 = vadd.f32 %v190, %v194
    %v199 = vadd.f32 %v191, %v195
    %v200 = vsel %vm155, 1, 0
    %vm201 = vcmp.eq.s32.totalorder %v200, 1
    %v202 = vsel %vm201, %v196, 0.0
    %v203 = vsel %vm201, %v197, 0.0
    %v204 = vsel %vm201, %v198, 0.0
    %v205 = vsel %vm201, %v199, 0.0
    %v206 = vadd.f32 %v202, %v203
    %v207 = vadd.f32 %v206, %v204
    %v208 = vadd.f32 %v207, %v205
    %209 = vadd.xlane.f32.xlu0 %v208
    %v210 = vpop.xlane.xlu0 %209
    %v211 = vrot.slane %v210, 4
    %v212 = vadd.f32 %v210, %v211
    %v213 = vrot.slane %v212, 2
    %v214 = vadd.f32 %v212, %v213
    %v215 = vrot.slane %v214, 1
    %v216 = vadd.f32 %v214, %v215
    %s217 = vtos %v216
    %v218 = vlaneseq
    %v219 = vshrl.u32 %v218, 7
    %vm220 = vcmp.eq.s32.totalorder %v219, 0
    %vm221 = vcmp.eq.s32.totalorder %v219, 1
    %v222 = vstv %s217
    %v223 = vsel %vm221, %v222, 0.0
    %v224 = vstv %s167
    %v225 = vsel %vm220, %v224, %v223
    %226 = vst [vmem:[#allocation13] sm:$0xff] %v225
    // Predicated region
    $region50: #{tpu_custom_call.1} parent=1 // pred_check
      _
    $region51: #{tpu_custom_call.1} parent=1 // pred_check_branch
      %228 = sbr.rel (0) target = $region53
    $region52: #{tpu_custom_call.1} parent=1 // pred_region
      %s230 = ssub.s32 128, 128
      %231 = vsyncadd [#allocation4], %s230
      %s233 = sshll.u32 [#allocation13], 4
      %s234 = int_to_ptr.vmem [resolvable:$true] %s233
      %236 = dma.vmem_to_hbm [thread:$0]  %s234, 128, %s6, [#allocation4]
    $region53: #{tpu_custom_call.1} parent=1 // pred_fallthru
      _
    // Predicated region
    $region54: #{tpu_custom_call.1} parent=1 // pred_check
      _
    $region55: #{tpu_custom_call.1} parent=1 // pred_check_branch
      %238 = sbr.rel (0) target = $region57
    $region56: #{tpu_custom_call.1} parent=1 // pred_region
      %239 = dma.done [#allocation4], 128
    $region57: #{tpu_custom_call.1} parent=1 // pred_fallthru
      _
    %240 = vsyncpa [#allocation3], 1
    %241 = vsyncpa [#allocation6], 1
    %242 = vsyncpa [#allocation9], 1
    %243 = vsyncpa [#allocation12], 1
    %244 = vsyncpa [#allocation4], 1

</llo_original>
